<compile_context>
chip_gen: v7x
topology: tpu7x:2x2x1
jax: 0.10.0
libtpu: 0.0.40
codegen_flags: <defaults>
</compile_context>

<pallas_src>
import jax
import jax.numpy as jnp
from jax import lax
from jax.experimental import pallas as pl
from jax.experimental.pallas import tpu as pltpu


def _round_up(n, m):
    return ((n + m - 1) // m) * m


def _ceil_div(a, b):
    return -(-a // b)


def _sublane_multiple(dtype):
    # f32 -> 8, bf16/f16 -> 16, int8/fp8 -> 32
    itemsize = jnp.dtype(dtype).itemsize
    return max(8, 32 // max(itemsize, 1))


def _pick_tile(n, quantum, floor, ceiling):
    """Tile size (multiple of `quantum`, <= ceiling) minimizing padding of n.

    If the quantum-rounded dim fits under the ceiling, use it directly
    (single tile: minimal padding AND fewest grid steps).  Otherwise search
    tiles in [floor, ceiling] and pick the one minimizing the padded size,
    breaking ties towards the larger tile (fewer grid steps).
    """
    ceiling = max(quantum, _round_up(ceiling, quantum))
    floor = max(quantum, min(_round_up(floor, quantum), ceiling))
    n_q = _round_up(max(n, 1), quantum)
    if n_q <= ceiling:
        return n_q
    best_t, best_pad = None, None
    t = floor
    while t <= ceiling:
        pad = _round_up(n, t) - n
        if best_pad is None or pad < best_pad or (pad == best_pad and t > best_t):
            best_t, best_pad = t, pad
        t += quantum
    return best_t


def _est_vmem_bytes(tm, tn, d_aug, in_itemsize, out_itemsize):
    # Double-buffered pipeline tiles; the last dim lane-pads to 128 in VMEM.
    d_lane = _round_up(d_aug, 128)
    return 2 * (tm * d_lane * in_itemsize
                + tn * d_lane * in_itemsize
                + tm * tn * out_itemsize)


def _pairwise_dist_kernel(a_ref, b_ref, p_ref):
    # a_ref: (1, TM, D+2) = [ x     | 1       | ||x||^2 ]
    # b_ref: (1, TN, D+2) = [ -2*y  | ||y||^2 | 1       ]
    # A single MXU contraction over the augmented K dim yields the full
    # distance tile; the only remaining work is the (optional) cast and store.
    p_ref[0] = lax.dot_general(
        a_ref[0], b_ref[0],
        dimension_numbers=(((1,), (1,)), ((), ())),
        preferred_element_type=jnp.float32,
    ).astype(p_ref.dtype)


def batch_pairwise_dist(x, y, *, tm=512, tn=2048, out_dtype=None):
    """Pallas TPU implementation of _Distance.batch_pairwise_dist.

    x: (B, Nx, D), y: (B, Ny, D) -> P: (B, Nx, Ny).
    `tm` / `tn` are tile-size *ceilings* along Nx / Ny.
    """
    bs, nx, d = x.shape
    bs_y, ny, d_y = y.shape
    assert bs == bs_y and d == d_y, "x and y must share batch and point_dim"

    in_dtype = jnp.promote_types(x.dtype, y.dtype)
    if out_dtype is None:
        out_dtype = in_dtype
    mxu_dtype = jnp.promote_types(in_dtype, out_dtype)

    # --- K-augmentation (wrapper side; O((Nx+Ny)*D), negligible vs output) ---
    x32 = x.astype(jnp.float32)
    y32 = y.astype(jnp.float32)
    rx = jnp.sum(x32 * x32, axis=-1, keepdims=True)            # (B, Nx, 1)
    ry = jnp.sum(y32 * y32, axis=-1, keepdims=True)            # (B, Ny, 1)
    a = jnp.concatenate([x32, jnp.ones_like(rx), rx], axis=-1).astype(mxu_dtype)
    b = jnp.concatenate([-2.0 * y32, ry, jnp.ones_like(ry)], axis=-1).astype(mxu_dtype)
    d_aug = d + 2

    # --- tile selection -------------------------------------------------
    sub = max(_sublane_multiple(mxu_dtype), _sublane_multiple(out_dtype))
    tm = _pick_tile(nx, sub, 256, tm)     # sublane axis of the output tile
    tn = _pick_tile(ny, 128, 512, tn)     # lane axis: multiple of 128

    in_item = jnp.dtype(mxu_dtype).itemsize
    out_item = jnp.dtype(out_dtype).itemsize

    # Keep double-buffered tiles under every generation's scoped-VMEM budget
    # (v7x: 32 MiB scoped / 64 MiB physical).
    vmem_budget = 20 * 1024 * 1024
    while _est_vmem_bytes(tm, tn, d_aug, in_item, out_item) > vmem_budget and tn > 128:
        tn = _round_up(_ceil_div(tn, 2), 128)
    while _est_vmem_bytes(tm, tn, d_aug, in_item, out_item) > vmem_budget and tm > sub:
        tm = _round_up(_ceil_div(tm, 2), sub)

    nx_pad = _round_up(nx, tm)
    ny_pad = _round_up(ny, tn)

    # Megacore guard: keep >= 4 grid steps so both v7x TensorCores get work.
    # Splitting TM is nearly free (sublane quantum), so prefer it over TN.
    min_steps = 4

    def _steps():
        return bs * (nx_pad // tm) * (ny_pad // tn)

    while _steps() < min_steps and tm > sub:
        tm = _round_up(_ceil_div(tm, 2), sub)
        nx_pad = _round_up(nx, tm)
    while _steps() < min_steps and tn > 128:
        tn = _round_up(_ceil_div(tn, 2), 128)
        ny_pad = _round_up(ny, tn)

    if nx_pad != nx:
        a = jnp.pad(a, ((0, 0), (0, nx_pad - nx), (0, 0)))
    if ny_pad != ny:
        b = jnp.pad(b, ((0, 0), (0, ny_pad - ny), (0, 0)))

    grid = (bs, nx_pad // tm, ny_pad // tn)

    cost = pl.CostEstimate(
        flops=2 * bs * nx * ny * d_aug,
        transcendentals=0,
        bytes_accessed=(bs * nx * d_aug * in_item
                        + bs * ny * d_aug * in_item
                        + bs * nx * ny * out_item),
    )

    p_pad = pl.pallas_call(
        _pairwise_dist_kernel,
        out_shape=jax.ShapeDtypeStruct((bs, nx_pad, ny_pad), out_dtype),
        grid_spec=pltpu.PrefetchScalarGridSpec(
            num_scalar_prefetch=0,
            grid=grid,
            in_specs=[
                pl.BlockSpec((1, tm, d_aug), lambda bb, i, j: (bb, i, 0)),
                pl.BlockSpec((1, tn, d_aug), lambda bb, i, j: (bb, j, 0)),
            ],
            out_specs=pl.BlockSpec((1, tm, tn), lambda bb, i, j: (bb, i, j)),
        ),
        compiler_params=pltpu.CompilerParams(
            dimension_semantics=("parallel", "parallel", "parallel"),
            vmem_limit_bytes=32 * 1024 * 1024,
        ),
        cost_estimate=cost,
    )(a, b)

    # Padded rows/cols of `a`/`b` are all-zero and only produce extra output
    # rows/cols (the contraction dim is never padded); slice them off.
    return p_pad[:, :nx, :ny]


def _reference_batch_pairwise_dist(x, y):
    # Pure-JAX mirror of the PyTorch bmm-based code (HIGHEST precision so the
    # check isn't polluted by XLA's default low-precision f32 matmul passes).
    hp = lax.Precision.HIGHEST
    xx = jnp.einsum("bnd,bmd->bnm", x, x, precision=hp)
    yy = jnp.einsum("bnd,bmd->bnm", y, y, precision=hp)
    zz = jnp.einsum("bnd,bmd->bnm", x, y, precision=hp)
    rx = jnp.diagonal(xx, axis1=1, axis2=2)[:, :, None]   # (B, Nx, 1)
    ry = jnp.diagonal(yy, axis1=1, axis2=2)[:, None, :]   # (B, 1, Ny)
    return rx + ry - 2.0 * zz


if __name__ == "__main__":
    key = jax.random.PRNGKey(0)
    kx, ky = jax.random.split(key)

    # Small shapes consistent with the module's (batch, num_points, point_dim).
    B, Nx, Ny, D = 2, 8, 16, 32
    x = jax.random.normal(kx, (B, Nx, D), dtype=jnp.float32)
    y = jax.random.normal(ky, (B, Ny, D), dtype=jnp.float32)

    P = batch_pairwise_dist(x, y)
    jax.block_until_ready(P)
    P_ref = _reference_batch_pairwise_dist(x, y)
    assert P.shape == (B, Nx, Ny)
    assert jnp.allclose(P, P_ref, atol=1e-2, rtol=1e-3), "mismatch vs reference"

    # Ragged point-cloud-like check: exercises the padding-minimising tile
    # pick (Ny=530 -> TN=640, Nx=300 -> TM<=304), multi-tile grid and the
    # megacore min-steps split.
    kx2, ky2 = jax.random.split(ky)
    B2, Nx2, Ny2, D2 = 2, 300, 530, 3
    x2 = jax.random.normal(kx2, (B2, Nx2, D2), dtype=jnp.float32)
    y2 = jax.random.normal(ky2, (B2, Ny2, D2), dtype=jnp.float32)
    P2 = batch_pairwise_dist(x2, y2)
    jax.block_until_ready(P2)
    P2_ref = _reference_batch_pairwise_dist(x2, y2)
    assert P2.shape == (B2, Nx2, Ny2)
    assert jnp.allclose(P2, P2_ref, atol=1e-2, rtol=1e-3), "mismatch (ragged)"

    print("KERNEL_OK")
</pallas_src>

<mosaic_0001>
module attributes {stable_mosaic.version = 11 : i64} {
  func.func @_pairwise_dist_kernel(%arg0: i32, %arg1: i32, %arg2: i32, %arg3: memref<1x8x34xf32, #tpu.memory_space<vmem>>, %arg4: memref<1x128x34xf32, #tpu.memory_space<vmem>>, %arg5: memref<1x8x128xf32, #tpu.memory_space<vmem>>) attributes {dimension_semantics = [#tpu.dimension_semantics<parallel>, #tpu.dimension_semantics<parallel>, #tpu.dimension_semantics<parallel>], iteration_bounds = array<i64: 2, 1, 1>, scalar_prefetch = 0 : i64, scratch_operands = 0 : i64, tpu.core_type = #tpu.core_type<tc>, window_params = [{transform_indices = @transform_0, window_bounds = array<i64: 1, 8, 34>}, {transform_indices = @transform_1, window_bounds = array<i64: 1, 128, 34>}, {transform_indices = @transform_2, window_bounds = array<i64: 1, 8, 128>}]} {
    %c0 = arith.constant 0 : index
    %c0_0 = arith.constant 0 : index
    %c0_1 = arith.constant 0 : index
    %0 = vector.load %arg3[%c0, %c0_0, %c0_1] : memref<1x8x34xf32, #tpu.memory_space<vmem>>, vector<1x8x34xf32>
    %1 = vector.shape_cast %0 : vector<1x8x34xf32> to vector<8x34xf32>
    %c0_2 = arith.constant 0 : index
    %c0_3 = arith.constant 0 : index
    %c0_4 = arith.constant 0 : index
    %2 = vector.load %arg4[%c0_2, %c0_3, %c0_4] : memref<1x128x34xf32, #tpu.memory_space<vmem>>, vector<1x128x34xf32>
    %3 = vector.shape_cast %2 : vector<1x128x34xf32> to vector<128x34xf32>
    %cst = arith.constant dense<0.000000e+00> : vector<8x128xf32>
    %4 = tpu.matmul %1, %3, %cst {dimension_numbers = #tpu.dot_dimension_numbers<[1], [1], [0], [0], [0, 0, 1, 0], [], []>} : vector<8x34xf32>, vector<128x34xf32>, vector<8x128xf32> -> vector<8x128xf32>
    %c0_5 = arith.constant 0 : index
    %c0_6 = arith.constant 0 : index
    %c0_7 = arith.constant 0 : index
    %5 = vector.load %arg5[%c0_5, %c0_6, %c0_7] : memref<1x8x128xf32, #tpu.memory_space<vmem>>, vector<1x8x128xf32>
    %6 = vector.shape_cast %5 : vector<1x8x128xf32> to vector<8x128xf32>
    %7 = vector.shape_cast %4 : vector<8x128xf32> to vector<1x8x128xf32>
    tpu.vector_store %arg5[%c0_5, %c0_6, %c0_7], %7 {strides = array<i32>} : memref<1x8x128xf32, #tpu.memory_space<vmem>>, vector<1x8x128xf32>,
    return
  }
  func.func @transform_0(%arg0: i32, %arg1: i32, %arg2: i32) -> (i32, i32, i32) {
    %c0_i32 = arith.constant 0 : i32
    %c0_i32_0 = arith.constant 0 : i32
    return %arg0, %arg1, %c0_i32 : i32, i32, i32
  }
  func.func @transform_1(%arg0: i32, %arg1: i32, %arg2: i32) -> (i32, i32, i32) {
    %c0_i32 = arith.constant 0 : i32
    %c0_i32_0 = arith.constant 0 : i32
    return %arg0, %arg2, %c0_i32 : i32, i32, i32
  }
  func.func @transform_2(%arg0: i32, %arg1: i32, %arg2: i32) -> (i32, i32, i32) {
    %c0_i32 = arith.constant 0 : i32
    return %arg0, %arg1, %arg2 : i32, i32, i32
  }
}

</mosaic_0001>

<llo_original>
// kernel: tpu_custom_call.1
$region0: #{tpu_custom_call.1}
  #allocation0 [shape = 'u32[]', space=smem, size = 0x4, offset = 0x4, fixed_abs, tag = 'smem constant byte address 0x4 - core index']
  #allocation1 [shape = 'u32[144,128]{1,0:T(1,128)}', space=vmem, size = 0x12000, scoped, tag = 'internal scratch']
  %s0 = inlined_call_operand.vmem [shape: f32[2,8,34], index: 0, kind: input, shape index: {}]
  %s1 = inlined_call_operand.vmem [shape: f32[2,128,34], index: 1, kind: input, shape index: {}]
  %s2 = inlined_call_operand.hbm [shape: f32[2,8,128], index: 2, kind: output, shape index: {}]
  %s3 = sld [smem:[#allocation0]]
  $region41: #{tpu_custom_call.1} parent=0
    _
  %s5 = ssub.s32 1, %s3
  %s6 = scalar_select 0, %s5, %s3
  $region1: #{tpu_custom_call.1} parent=0
    #allocation2 [shape = 'u8[8192]{0}', space=vmem, size = 0x2000, scoped, tag = 'output window, operand 0']
    #allocation3 [shape = 's32[2]{0}', space=sflag, size = 0x8, scoped, tag = 'scoped memory for tpu_custom_call.1']
    %7 = vsyncpa [#allocation3], 0
    %s8 = scalar_lea.sflag [#allocation3], 1
    %9 = vsyncpa %s8, 0
    loop: start=0, step=1, limit=4
    $region2: #{tpu_custom_call.1} parent=1 // loop_pre_header
      _
    $region3: #{tpu_custom_call.1} parent=1 // loop_header
      %s11 = sphi 0, %s15
      %p12 = scmp.ge.s32.totalorder %s11, 4
      %s18 = sphi 0, %s37
      %s19 = sphi 0, %s33
      %s20 = sphi 0, %s29
      %s21 = sphi 0, %s18
      %s22 = sphi 0, %s19
      %s23 = sphi 0, %s20
      %s24 = sphi 0, %s21
      %s25 = sphi 0, %s22
      %s26 = sphi 0, %s23
      %s42 = sphi 0, %s44
      %s45 = sphi 0, %s42
      %s46 = sphi 0, %s45
      %s62 = sphi 0, %s46
      %s70 = sphi 0, %s72
      %s73 = sphi 0, %s70
      %s74 = sphi 0, %s73
      %s90 = sphi 0, %s74
      %s100 = sphi 0, %s102
      %s103 = sphi 0, %s100
      %s104 = sphi 0, %s103
      %s120 = sphi 0, %s104
    $region4: #{tpu_custom_call.1} parent=1 // loop_header_branch
      %14 = sbr.rel (%p12) target = $region8
    $region5: #{tpu_custom_call.1} parent=1 // loop_body
      %s16 = ssub.s32 %s11, 1
      %s17 = ssub.s32 %s11, 2
      %s27 = sadd.s32 1, %s20
      %p28 = scmp.ge.s32.totalorder %s27, 1
      %s29 = scalar_select %p28, 0, %s27
      %s30 = sadd.s32 1, %s19
      %s31 = scalar_select %p28, %s30, %s19
      %p32 = scmp.ge.s32.totalorder %s31, 1
      %s33 = scalar_select %p32, 0, %s31
      %s34 = sadd.s32 1, %s18
      %s35 = scalar_select %p32, %s34, %s18
      %p36 = scmp.ge.s32.totalorder %s35, 2
      %s37 = scalar_select %p36, 0, %s35
      %s38 = ssub.s32 %s18, %s37
      %s39 = ssub.s32 %s19, %s33
      %s40 = sor.u32 %s38, %s39
      %p41 = scmp.eq.s32.totalorder %s40, 0
      %s43 = sadd.s32 %s42, 1
      %s44 = scalar_select %p41, %s42, %s43
      %p47 = pneg %p41
      %p48 = scmp.eq.s32.totalorder %s11, 1
      %p49 = por %p47, %p48
      %p50 = scmp.ne.s32.totalorder %s42, %s45
      %p51 = scmp.eq.s32.totalorder %s11, 0
      %p52 = por %p50, %p51
      %p53 = scmp.ne.s32.totalorder %s42, %s45
      %p54 = scmp.eq.s32.totalorder %s16, 1
      %p55 = por %p53, %p54
      %p56 = scmp.ne.s32.totalorder %s45, %s46
      %p57 = scmp.eq.s32.totalorder %s16, 0
      %p58 = por %p56, %p57
      %p59 = scmp.ne.s32.totalorder %s45, %s46
      %p60 = scmp.eq.s32.totalorder %s17, 1
      %p61 = por %p59, %p60
      %p63 = scmp.ne.s32.totalorder %s46, %s62
      %p64 = scmp.eq.s32.totalorder %s17, 0
      %p65 = por %p63, %p64
      %s66 = ssub.s32 %s18, %s37
      %s67 = ssub.s32 %s20, %s29
      %s68 = sor.u32 %s66, %s67
      %p69 = scmp.eq.s32.totalorder %s68, 0
      %s71 = sadd.s32 %s70, 1
      %s72 = scalar_select %p69, %s70, %s71
      %p75 = pneg %p69
      %p76 = scmp.eq.s32.totalorder %s11, 1
      %p77 = por %p75, %p76
      %p78 = scmp.ne.s32.totalorder %s70, %s73
      %p79 = scmp.eq.s32.totalorder %s11, 0
      %p80 = por %p78, %p79
      %p81 = scmp.ne.s32.totalorder %s70, %s73
      %p82 = scmp.eq.s32.totalorder %s16, 1
      %p83 = por %p81, %p82
      %p84 = scmp.ne.s32.totalorder %s73, %s74
      %p85 = scmp.eq.s32.totalorder %s16, 0
      %p86 = por %p84, %p85
      %p87 = scmp.ne.s32.totalorder %s73, %s74
      %p88 = scmp.eq.s32.totalorder %s17, 1
      %p89 = por %p87, %p88
      %p91 = scmp.ne.s32.totalorder %s74, %s90
      %p92 = scmp.eq.s32.totalorder %s17, 0
      %p93 = por %p91, %p92
      %s94 = ssub.s32 %s18, %s37
      %s95 = ssub.s32 %s19, %s33
      %s96 = sor.u32 %s94, %s95
      %s97 = ssub.s32 %s20, %s29
      %s98 = sor.u32 %s96, %s97
      %p99 = scmp.eq.s32.totalorder %s98, 0
      %s101 = sadd.s32 %s100, 1
      %s102 = scalar_select %p99, %s100, %s101
      %p105 = pneg %p99
      %p106 = scmp.eq.s32.totalorder %s11, 1
      %p107 = por %p105, %p106
      %p108 = scmp.ne.s32.totalorder %s100, %s103
      %p109 = scmp.eq.s32.totalorder %s11, 0
      %p110 = por %p108, %p109
      %p111 = scmp.ne.s32.totalorder %s100, %s103
      %p112 = scmp.eq.s32.totalorder %s16, 1
      %p113 = por %p111, %p112
      %p114 = scmp.ne.s32.totalorder %s103, %s104
      %p115 = scmp.eq.s32.totalorder %s16, 0
      %p116 = por %p114, %p115
      %p117 = scmp.ne.s32.totalorder %s103, %s104
      %p118 = scmp.eq.s32.totalorder %s17, 1
      %p119 = por %p117, %p118
      %p121 = scmp.ne.s32.totalorder %s104, %s120
      %p122 = scmp.eq.s32.totalorder %s17, 0
      %p123 = por %p121, %p122
      %p124 = scmp.le.s32.totalorder 1, %s11
      %p125 = scmp.lt.s32.totalorder %s11, 3
      %p126 = pnand %p124, %p125
      %p127 = pneg %p126
      // Predicated region
      $region9: #{tpu_custom_call.1} parent=5 // pred_check
        _
      $region10: #{tpu_custom_call.1} parent=5 // pred_check_branch
        %129 = sbr.rel (%p126) target = $region12
      $region11: #{tpu_custom_call.1} parent=5 // pred_region
        %s130 = ssub.s32 %s11, 1
      $region12: #{tpu_custom_call.1} parent=5 // pred_fallthru
        _
      %p131 = scmp.lt.s32.totalorder %s11, 2
      // Predicated region
      $region13: #{tpu_custom_call.1} parent=5 // pred_check
        %p132 = pneg %p131
      $region14: #{tpu_custom_call.1} parent=5 // pred_check_branch
        %134 = sbr.rel (%p132) target = $region16
      $region15: #{tpu_custom_call.1} parent=5 // pred_region
        // Predicated region
        $region17: #{tpu_custom_call.1} parent=15 // pred_check
          %p135 = pneg %p52
        $region18: #{tpu_custom_call.1} parent=15 // pred_check_branch
          %137 = sbr.rel (%p135) target = $region20
        $region19: #{tpu_custom_call.1} parent=15 // pred_region
          %p138 = scmp.lt.s32.totalorder %s18, 1
          %s139 = scalar_select %p138, %s18, 1
          %p140 = scmp.lt.s32.totalorder %s19, 0
          %s141 = scalar_select %p140, %s19, 0
          %s142 = sadd.s32 %s141, %s139
          %s143 = smul.addr %s142, 8
          %s144 = scalar_lea.vmem %s0, %s143
        $region20: #{tpu_custom_call.1} parent=15 // pred_fallthru
          _
        // Predicated region
        $region21: #{tpu_custom_call.1} parent=15 // pred_check
          %p145 = pneg %p80
        $region22: #{tpu_custom_call.1} parent=15 // pred_check_branch
          %147 = sbr.rel (%p145) target = $region24
        $region23: #{tpu_custom_call.1} parent=15 // pred_region
          %s148 = smul.u32 16, %s20
          %p149 = scmp.lt.s32.totalorder %s18, 1
          %s150 = scalar_select %p149, %s18, 1
          %p151 = scmp.lt.s32.totalorder %s148, 15
          %s152 = scalar_select %p151, %s148, 15
          %s153 = smul.addr %s150, 16
          %s154 = sadd.s32 %s152, %s153
          %s155 = smul.addr %s154, 8
          %s156 = scalar_lea.vmem %s1, %s155
          %s157 = smul.u32 16, %s20
        $region24: #{tpu_custom_call.1} parent=15 // pred_fallthru
          _
      $region16: #{tpu_custom_call.1} parent=5 // pred_fallthru
        _
      %p158 = scmp.le.s32.totalorder 1, %s11
      %p159 = scmp.lt.s32.totalorder %s11, 3
      %p160 = pnand %p158, %p159
      %p161 = pneg %p160
      // Predicated region
      $region25: #{tpu_custom_call.1} parent=5 // pred_check
        _
      $region26: #{tpu_custom_call.1} parent=5 // pred_check_branch
        %163 = sbr.rel (%p160) target = $region28
      $region27: #{tpu_custom_call.1} parent=5 // pred_region
        %s164 = ssub.s32 %s11, 1
        %p165 = scmp.lt.s32.totalorder %s21, 1
        %s166 = scalar_select %p165, %s21, 1
        %p167 = scmp.lt.s32.totalorder %s22, 0
        %s168 = scalar_select %p167, %s22, 0
        %s169 = sadd.s32 %s168, %s166
        %s170 = smul.addr %s169, 8
        %s171 = scalar_lea.vmem %s0, %s170
        %p172 = pneg %p58
        %p173 = pneg %p55
        %s174 = smul.u32 16, %s23
        %p175 = scmp.lt.s32.totalorder %s21, 1
        %s176 = scalar_select %p175, %s21, 1
        %p177 = scmp.lt.s32.totalorder %s174, 15
        %s178 = scalar_select %p177, %s174, 15
        %s179 = smul.addr %s176, 16
        %s180 = sadd.s32 %s178, %s179
        %s181 = smul.addr %s180, 8
        %s182 = scalar_lea.vmem %s1, %s181
        %p183 = pneg %p86
        %p184 = pneg %p83
        %p185 = pneg %p116
        %p186 = pneg %p113
        %s187 = sand.u32 %s103, 1
        %s188 = scalar_lea.sflag [#allocation3], %s187
        %s189 = sand.u32 %s103, 1
        %s190 = smul.addr %s189, 8
        %s191 = scalar_lea.vmem [#allocation2], %s190
        %p192 = scmp.lt.s32.totalorder %s21, 1
        %s193 = scalar_select %p192, %s21, 1
        %p194 = scmp.lt.s32.totalorder %s22, 0
        %s195 = scalar_select %p194, %s22, 0
        %s196 = sadd.s32 %s195, %s193
        %s197 = smul.addr %s196, 8
        %s198 = scalar_lea.vmem %s0, %s197
        %s199 = smul.u32 16, %s23
        %p200 = scmp.lt.s32.totalorder %s21, 1
        %s201 = scalar_select %p200, %s21, 1
        %p202 = scmp.lt.s32.totalorder %s199, 15
        %s203 = scalar_select %p202, %s199, 15
        %s204 = smul.addr %s201, 16
        %s205 = sadd.s32 %s203, %s204
        %s206 = smul.addr %s205, 8
        %s207 = scalar_lea.vmem %s1, %s206
        %s208 = smul.u32 16, %s23
        %v209 = vld [vmem:[%s198] sm:$0xff]
        %v210 = vld [vmem:[%s207] sm:$0xff]
        %v211 = vld [vmem:[%s207 + $0x8] sm:$0xff]
        %v212 = vld [vmem:[%s207 + $0x10] sm:$0xff]
        %v213 = vld [vmem:[%s207 + $0x18] sm:$0xff]
        %v214 = vld [vmem:[%s207 + $0x20] sm:$0xff]
        %v215 = vld [vmem:[%s207 + $0x28] sm:$0xff]
        %v216 = vld [vmem:[%s207 + $0x30] sm:$0xff]
        %v217 = vld [vmem:[%s207 + $0x38] sm:$0xff]
        %v218 = vld [vmem:[%s207 + $0x40] sm:$0xff]
        %v219 = vld [vmem:[%s207 + $0x48] sm:$0xff]
        %v220 = vld [vmem:[%s207 + $0x50] sm:$0xff]
        %v221 = vld [vmem:[%s207 + $0x58] sm:$0xff]
        %v222 = vld [vmem:[%s207 + $0x60] sm:$0xff]
        %v223 = vld [vmem:[%s207 + $0x68] sm:$0xff]
        %v224 = vld [vmem:[%s207 + $0x70] sm:$0xff]
        %v225 = vld [vmem:[%s207 + $0x78] sm:$0xff]
        %vm226 = vcmask 277504
        %v228 = vsel %vm226, %v209, 0
        %v231 = vsel %vm226, %v210, 0
        %v234 = vsel %vm226, %v211, 0
        %v237 = vsel %vm226, %v212, 0
        %v240 = vsel %vm226, %v213, 0
        %v243 = vsel %vm226, %v214, 0
        %v246 = vsel %vm226, %v215, 0
        %v249 = vsel %vm226, %v216, 0
        %v252 = vsel %vm226, %v217, 0
        %v255 = vsel %vm226, %v218, 0
        %v258 = vsel %vm226, %v219, 0
        %v261 = vsel %vm226, %v220, 0
        %v264 = vsel %vm226, %v221, 0
        %v267 = vsel %vm226, %v222, 0
        %v270 = vsel %vm226, %v223, 0
        %v273 = vsel %vm226, %v224, 0
        %v276 = vsel %vm226, %v225, 0
        %278 = vmatprep.subr.mxu0 0.0
        %279 = vmatpush1.xpose.msra.mxu0 %v231
        %280 = vmatprep.subr.mxu0 0.0
        %281 = vmatpush1.xpose.msra.mxu0 %v234
        %282 = vmatprep.subr.mxu0 0.0
        %283 = vmatpush1.xpose.msra.mxu0 %v237
        %284 = vmatprep.subr.mxu0 0.0
        %285 = vmatpush1.xpose.msra.mxu0 %v240
        %286 = vmatprep.subr.mxu0 0.0
        %287 = vmatpush1.xpose.msra.mxu0 %v243
        %288 = vmatprep.subr.mxu0 0.0
        %289 = vmatpush1.xpose.msra.mxu0 %v246
        %290 = vmatprep.subr.mxu0 0.0
        %291 = vmatpush1.xpose.msra.mxu0 %v249
        %292 = vmatprep.subr.mxu0 0.0
        %293 = vmatpush1.xpose.msra.mxu0 %v252
        %294 = vmatprep.subr.mxu0 0.0
        %295 = vmatpush1.xpose.msra.mxu0 %v255
        %296 = vmatprep.subr.mxu0 0.0
        %297 = vmatpush1.xpose.msra.mxu0 %v258
        %298 = vmatprep.subr.mxu0 0.0
        %299 = vmatpush1.xpose.msra.mxu0 %v261
        %300 = vmatprep.subr.mxu0 0.0
        %301 = vmatpush1.xpose.msra.mxu0 %v264
        %302 = vmatprep.subr.mxu0 0.0
        %303 = vmatpush1.xpose.msra.mxu0 %v267
        %304 = vmatprep.subr.mxu0 0.0
        %305 = vmatpush1.xpose.msra.mxu0 %v270
        %306 = vmatprep.subr.mxu0 0.0
        %307 = vmatpush1.xpose.msra.mxu0 %v273
        %308 = vmatprep.subr.mxu0 0.0
        %309 = vmatpush1.xpose.msra.mxu0 %v276
        %310 = vmatprep.subr.mxu0 0.0
        %311 = vmatpush1.xpose.msra.mxu0 0.0
        %312 = vmatprep.subr.mxu0 0.0
        %313 = vmatpush1.xpose.msra.mxu0 0.0
        %314 = vmatprep.subr.mxu0 0.0
        %315 = vmatpush1.xpose.msra.mxu0 0.0
        %316 = vmatprep.subr.mxu0 0.0
        %317 = vmatpush1.xpose.msra.mxu0 0.0
        %318 = vmatprep.subr.mxu0 0.0
        %319 = vmatpush1.xpose.msra.mxu0 0.0
        %320 = vmatprep.subr.mxu0 0.0
        %321 = vmatpush1.xpose.msra.mxu0 0.0
        %322 = vmatprep.subr.mxu0 0.0
        %323 = vmatpush1.xpose.msra.mxu0 0.0
        %324 = vmatprep.subr.mxu0 0.0
        %325 = vmatpush1.xpose.msra.mxu0 0.0
        %326 = vmatprep.subr.mxu0 0.0
        %327 = vmatpush1.xpose.msra.mxu0 0.0
        %328 = vmatprep.subr.mxu0 0.0
        %329 = vmatpush1.xpose.msra.mxu0 0.0
        %330 = vmatprep.subr.mxu0 0.0
        %331 = vmatpush1.xpose.msra.mxu0 0.0
        %332 = vmatprep.subr.mxu0 0.0
        %333 = vmatpush1.xpose.msra.mxu0 0.0
        %334 = vmatprep.subr.mxu0 0.0
        %335 = vmatpush1.xpose.msra.mxu0 0.0
        %336 = vmatprep.subr.mxu0 0.0
        %337 = vmatpush1.xpose.msra.mxu0 0.0
        %338 = vmatprep.subr.mxu0 0.0
        %339 = vmatpush1.xpose.msra.mxu0 0.0
        %340 = vmatprep.subr.mxu0 0.0
        %341 = vmatpush1.xpose.msra.mxu0 0.0
        %342 = vmatprep.mubr.f32.mxu0 0.0
        %343 = vmatmul.mubr.f32.gmra.mrb[0].mxu0 %v228
        %v344 = vpop.f32.mrb[0].mxu0
        %v345 = vadd.f32 0.0, %v344
        %v346 = vpop.f32.mrb[0].mxu0
        %347 = vdwg.mxu0
        %348 = vst [vmem:[%s191] sm:$0xff] %v345
        %s349 = sand.u32 %s103, 1
        %s350 = scalar_lea.sflag [#allocation3], %s349
        %s351 = sand.u32 %s103, 1
        %s352 = smul.addr %s351, 8
        %s353 = scalar_lea.vmem [#allocation2], %s352
        // Predicated region
        $region29: #{tpu_custom_call.1} parent=27 // pred_check
          %p354 = pneg %p113
        $region30: #{tpu_custom_call.1} parent=27 // pred_check_branch
          %356 = sbr.rel (%p354) target = $region32
        $region31: #{tpu_custom_call.1} parent=27 // pred_region
          %s358 = ssub.s32 128, 128
          %359 = vsyncadd %s350, %s358
          %s360 = sadd.s32 %s23, %s22
          %s361 = sadd.s32 %s360, %s21
          %s362 = smul.addr %s361, 128
          %s363 = scalar_lea.hbm %s2, %s362
          %s365 = sshll.u32 %s353, 4
          %s366 = int_to_ptr.vmem [resolvable:$true] %s365
          %368 = dma.vmem_to_hbm [thread:$0]  %s366, 128, %s363, %s350
        $region32: #{tpu_custom_call.1} parent=27 // pred_fallthru
          _
      $region28: #{tpu_custom_call.1} parent=5 // pred_fallthru
        _
      %p369 = scmp.le.s32.totalorder 2, %s11
      // Predicated region
      $region33: #{tpu_custom_call.1} parent=5 // pred_check
        %p370 = pneg %p369
      $region34: #{tpu_custom_call.1} parent=5 // pred_check_branch
        %372 = sbr.rel (%p370) target = $region36
      $region35: #{tpu_custom_call.1} parent=5 // pred_region
        %s373 = ssub.s32 %s11, 2
        // Predicated region
        $region37: #{tpu_custom_call.1} parent=35 // pred_check
          %p374 = pneg %p119
        $region38: #{tpu_custom_call.1} parent=35 // pred_check_branch
          %376 = sbr.rel (%p374) target = $region40
        $region39: #{tpu_custom_call.1} parent=35 // pred_region
          %s377 = sand.u32 %s104, 1
          %s378 = scalar_lea.sflag [#allocation3], %s377
          %s379 = sand.u32 %s104, 1
          %s380 = smul.addr %s379, 8
          %s381 = scalar_lea.vmem [#allocation2], %s380
          %382 = dma.done %s378, 128
        $region40: #{tpu_custom_call.1} parent=35 // pred_fallthru
          _
      $region36: #{tpu_custom_call.1} parent=5 // pred_fallthru
        _
    $region6: #{tpu_custom_call.1} parent=1 // loop_footer
      %s15 = sadd.s32 1, %s11
    $region7: #{tpu_custom_call.1} parent=1 // loop_footer_branch
      %10 = sbr.rel target = $region3
    $region8: #{tpu_custom_call.1} parent=1 // loop_exit
      _
    %383 = vsyncpa [#allocation3], 1
    %s384 = scalar_lea.sflag [#allocation3], 1
    %385 = vsyncpa %s384, 1

</llo_original>
